<compile_context>
chip_gen: v7x
topology: tpu7x:2x2x1
jax: 0.10.0
libtpu: 0.0.40
codegen_flags: <defaults>
</compile_context>

<pallas_src>
import functools

import jax
import jax.numpy as jnp
from jax.experimental import pallas as pl
from jax.experimental.pallas import tpu as pltpu


def _round_up(x, m):
    return (x + m - 1) // m * m


def _cdiv(a, b):
    return (a + b - 1) // b


def _head_kernel(x_ref, wd_ref, bd_ref, wo_ref, bo_ref, o_ref):
    # dense: [tb, Hp] @ [Hp, Hp] on the MXU, f32 accumulation.
    # astype is a no-op when features are already fed in bf16.
    x = x_ref[...].astype(wd_ref.dtype)
    h = jnp.dot(x, wd_ref[...], preferred_element_type=jnp.float32)
    # Bias add in f32, tanh in the matmul dtype (bf16): native bf16 EUP path
    # on v6e/v7x and no separate f32->bf16 cast before the second matmul.
    h = jnp.tanh((h + bd_ref[...]).astype(wo_ref.dtype))
    # out_proj: [tb, Hp] @ [Hp, Lp] on the MXU, f32 accumulation.
    y = jnp.dot(h, wo_ref[...], preferred_element_type=jnp.float32)
    o_ref[...] = (y + bo_ref[...]).astype(o_ref.dtype)


def prepare_head_params(w_dense, b_dense, w_out, b_out, *,
                        matmul_dtype=jnp.bfloat16):
    """One-time parameter prep (call OUTSIDE the inference hot path).

    PyTorch Linear layout is [out, in]; transpose to [in, out], zero-pad the
    hidden and label dims to multiples of 128 (lane-dense), and cast weight
    matrices to `matmul_dtype` (bf16 default; fp8 possible on v7x). Biases
    stay f32.
    """
    H = w_dense.shape[1]
    L = w_out.shape[0]
    Hp = _round_up(H, 128)
    Lp = _round_up(L, 128)

    wd = jnp.zeros((Hp, Hp), matmul_dtype).at[:H, :H].set(
        jnp.transpose(w_dense).astype(matmul_dtype))
    bd = jnp.zeros((1, Hp), jnp.float32).at[0, :H].set(
        b_dense.astype(jnp.float32))
    wo = jnp.zeros((Hp, Lp), matmul_dtype).at[:H, :L].set(
        jnp.transpose(w_out).astype(matmul_dtype))
    bo = jnp.zeros((1, Lp), jnp.float32).at[0, :L].set(
        b_out.astype(jnp.float32))
    return wd, bd, wo, bo


@functools.partial(jax.jit, static_argnames=("num_labels", "block_b"))
def roberta_classification_head(features, wd, bd, wo, bo, *,
                                num_labels, block_b=512):
    """features: [B, H] (f32 or bf16); (wd, bd, wo, bo) from prepare_head_params().
    Returns logits [B, num_labels] in features.dtype.

    block_b=512 default (v5e VMEM-safe); v6e can use 1024 if desired.
    """
    B, H = features.shape
    Hp = wd.shape[0]
    Lp = wo.shape[1]

    # Pad ONLY the hidden (reduction) dim when it is not lane-aligned; zeros
    # there are required for correctness.  The batch dim is never padded.
    x = features
    if Hp != H:
        x = jnp.pad(x, ((0, 0), (0, Hp - H)))

    # Near-equal, 8-aligned batch tiles; a single full-extent tile when the
    # whole batch fits in one block (no sublane-divisibility requirement then).
    num_tiles = max(1, _cdiv(B, block_b))
    if num_tiles == 1:
        tb = B
    else:
        tb = _round_up(_cdiv(B, num_tiles), 8)
    grid = (_cdiv(B, tb),)

    # Megacore: only shard the batch grid across TensorCores when each core
    # gets enough rows to amortize its private copy of the resident weights.
    parallel = grid[0] > 1 and B >= 1024
    dim_sem = ("parallel",) if parallel else ("arbitrary",)

    # Grid-invariant parameter blocks: single-buffer (no double-buffer waste).
    resident = dict(pipeline_mode=pl.Buffered(1))

    cost = pl.CostEstimate(
        flops=2 * B * Hp * Hp + 2 * B * Hp * Lp,
        transcendentals=B * Hp,
        bytes_accessed=(B * Hp * x.dtype.itemsize
                        + Hp * Hp * wd.dtype.itemsize
                        + Hp * Lp * wo.dtype.itemsize
                        + Hp * 4 + Lp * 4
                        + B * Lp * features.dtype.itemsize),
    )

    out = pl.pallas_call(
        _head_kernel,
        out_shape=jax.ShapeDtypeStruct((B, Lp), features.dtype),
        grid=grid,
        in_specs=[
            pl.BlockSpec((tb, Hp), lambda i: (i, 0)),              # x tile (pipelined)
            pl.BlockSpec((Hp, Hp), lambda i: (0, 0), **resident),  # dense weight
            pl.BlockSpec((1, Hp), lambda i: (0, 0), **resident),   # dense bias
            pl.BlockSpec((Hp, Lp), lambda i: (0, 0), **resident),  # out_proj weight
            pl.BlockSpec((1, Lp), lambda i: (0, 0), **resident),   # out_proj bias
        ],
        out_specs=pl.BlockSpec((tb, Lp), lambda i: (i, 0)),
        compiler_params=pltpu.CompilerParams(dimension_semantics=dim_sem),
        cost_estimate=cost,
    )(x, wd, bd, wo, bo)

    return out[:, :num_labels]


if __name__ == "__main__":
    # Small, module-consistent shapes.
    batch = 8
    hidden = 32       # config.hidden_size
    num_labels = 3    # config.num_labels

    key = jax.random.PRNGKey(0)
    k_x, k_wd, k_bd, k_wo, k_bo = jax.random.split(key, 5)

    # Deterministic synthetic parameters (PyTorch Linear layout: [out, in]).
    features = jax.random.normal(k_x, (batch, hidden), dtype=jnp.float32)
    w_dense = jax.random.normal(k_wd, (hidden, hidden), dtype=jnp.float32) * 0.05
    b_dense = jax.random.normal(k_bd, (hidden,), dtype=jnp.float32) * 0.05
    w_out = jax.random.normal(k_wo, (num_labels, hidden), dtype=jnp.float32) * 0.05
    b_out = jax.random.normal(k_bo, (num_labels,), dtype=jnp.float32) * 0.05

    # One-time prep (transpose + lane-pad + bf16 cast) outside the hot path.
    wd, bd, wo, bo = prepare_head_params(w_dense, b_dense, w_out, b_out)

    logits = roberta_classification_head(features, wd, bd, wo, bo,
                                         num_labels=num_labels)
    logits = jax.block_until_ready(logits)

    # Reference matching the kernel recipe (bf16 operands, f32 accum, bf16 tanh).
    x_bf = features.astype(jnp.bfloat16)
    h_ref = jnp.dot(x_bf, w_dense.astype(jnp.bfloat16).T,
                    preferred_element_type=jnp.float32) + b_dense
    h_ref = jnp.tanh(h_ref.astype(jnp.bfloat16))
    ref = jnp.dot(h_ref, w_out.astype(jnp.bfloat16).T,
                  preferred_element_type=jnp.float32) + b_out
    # Full f32 reference for a looser sanity bound.
    ref_f32 = jnp.tanh(features @ w_dense.T + b_dense) @ w_out.T + b_out

    assert logits.shape == (batch, num_labels)
    assert jnp.allclose(logits, ref, atol=5e-3, rtol=5e-3)
    assert jnp.allclose(logits, ref_f32, atol=3e-2, rtol=3e-2)

    print("KERNEL_OK")
</pallas_src>

<mosaic_0001>
module attributes {stable_mosaic.version = 11 : i64} {
  func.func @_head_kernel(%arg0: i32, %arg1: memref<8x128xf32, #tpu.memory_space<vmem>>, %arg2: memref<128x128xbf16, #tpu.memory_space<vmem>>, %arg3: memref<1x128xf32, #tpu.memory_space<vmem>>, %arg4: memref<128x128xbf16, #tpu.memory_space<vmem>>, %arg5: memref<1x128xf32, #tpu.memory_space<vmem>>, %arg6: memref<8x128xf32, #tpu.memory_space<vmem>>) attributes {dimension_semantics = [#tpu.dimension_semantics<arbitrary>], iteration_bounds = array<i64: 1>, scalar_prefetch = 0 : i64, scratch_operands = 0 : i64, tpu.core_type = #tpu.core_type<tc>, window_params = [{transform_indices = @transform_0, window_bounds = array<i64: 8, 128>}, {pipeline_mode = #tpu.pipeline_mode<synchronous>, transform_indices = @transform_1, window_bounds = array<i64: 128, 128>}, {pipeline_mode = #tpu.pipeline_mode<synchronous>, transform_indices = @transform_2, window_bounds = array<i64: 1, 128>}, {pipeline_mode = #tpu.pipeline_mode<synchronous>, transform_indices = @transform_3, window_bounds = array<i64: 128, 128>}, {pipeline_mode = #tpu.pipeline_mode<synchronous>, transform_indices = @transform_4, window_bounds = array<i64: 1, 128>}, {transform_indices = @transform_5, window_bounds = array<i64: 8, 128>}]} {
    %c0 = arith.constant 0 : index
    %c0_0 = arith.constant 0 : index
    %0 = vector.load %arg1[%c0, %c0_0] : memref<8x128xf32, #tpu.memory_space<vmem>>, vector<8x128xf32>
    %1 = arith.truncf %0 : vector<8x128xf32> to vector<8x128xbf16>
    %c0_1 = arith.constant 0 : index
    %c0_2 = arith.constant 0 : index
    %2 = vector.load %arg2[%c0_1, %c0_2] : memref<128x128xbf16, #tpu.memory_space<vmem>>, vector<128x128xbf16>
    %cst = arith.constant dense<0.000000e+00> : vector<8x128xf32>
    %3 = tpu.matmul %1, %2, %cst {dimension_numbers = #tpu.dot_dimension_numbers<[1], [0], [0], [1], [0, 0, 1, 1], [], []>} : vector<8x128xbf16>, vector<128x128xbf16>, vector<8x128xf32> -> vector<8x128xf32>
    %c0_3 = arith.constant 0 : index
    %c0_4 = arith.constant 0 : index
    %4 = vector.load %arg3[%c0_3, %c0_4] : memref<1x128xf32, #tpu.memory_space<vmem>>, vector<1x128xf32>
    %5 = vector.broadcast %4 : vector<1x128xf32> to vector<8x128xf32>
    %6 = arith.addf %3, %5 : vector<8x128xf32>
    %7 = arith.truncf %6 : vector<8x128xf32> to vector<8x128xbf16>
    %8 = math.tanh %7 : vector<8x128xbf16>
    %c0_5 = arith.constant 0 : index
    %c0_6 = arith.constant 0 : index
    %9 = vector.load %arg4[%c0_5, %c0_6] : memref<128x128xbf16, #tpu.memory_space<vmem>>, vector<128x128xbf16>
    %cst_7 = arith.constant dense<0.000000e+00> : vector<8x128xf32>
    %10 = tpu.matmul %8, %9, %cst_7 {dimension_numbers = #tpu.dot_dimension_numbers<[1], [0], [0], [1], [0, 0, 1, 1], [], []>} : vector<8x128xbf16>, vector<128x128xbf16>, vector<8x128xf32> -> vector<8x128xf32>
    %c0_8 = arith.constant 0 : index
    %c0_9 = arith.constant 0 : index
    %11 = vector.load %arg5[%c0_8, %c0_9] : memref<1x128xf32, #tpu.memory_space<vmem>>, vector<1x128xf32>
    %12 = vector.broadcast %11 : vector<1x128xf32> to vector<8x128xf32>
    %13 = arith.addf %10, %12 : vector<8x128xf32>
    %c0_10 = arith.constant 0 : index
    %c0_11 = arith.constant 0 : index
    %14 = vector.load %arg6[%c0_10, %c0_11] : memref<8x128xf32, #tpu.memory_space<vmem>>, vector<8x128xf32>
    tpu.vector_store %arg6[%c0_10, %c0_11], %13 {strides = array<i32>} : memref<8x128xf32, #tpu.memory_space<vmem>>, vector<8x128xf32>,
    return
  }
  func.func @transform_0(%arg0: i32) -> (i32, i32) {
    %c0_i32 = arith.constant 0 : i32
    %c0_i32_0 = arith.constant 0 : i32
    return %arg0, %c0_i32 : i32, i32
  }
  func.func @transform_1(%arg0: i32) -> (i32, i32) {
    %c0_i32 = arith.constant 0 : i32
    %c0_i32_0 = arith.constant 0 : i32
    %c0_i32_1 = arith.constant 0 : i32
    return %c0_i32, %c0_i32_0 : i32, i32
  }
  func.func @transform_2(%arg0: i32) -> (i32, i32) {
    %c0_i32 = arith.constant 0 : i32
    %c0_i32_0 = arith.constant 0 : i32
    %c0_i32_1 = arith.constant 0 : i32
    return %c0_i32, %c0_i32_0 : i32, i32
  }
  func.func @transform_3(%arg0: i32) -> (i32, i32) {
    %c0_i32 = arith.constant 0 : i32
    %c0_i32_0 = arith.constant 0 : i32
    %c0_i32_1 = arith.constant 0 : i32
    return %c0_i32, %c0_i32_0 : i32, i32
  }
  func.func @transform_4(%arg0: i32) -> (i32, i32) {
    %c0_i32 = arith.constant 0 : i32
    %c0_i32_0 = arith.constant 0 : i32
    %c0_i32_1 = arith.constant 0 : i32
    return %c0_i32, %c0_i32_0 : i32, i32
  }
  func.func @transform_5(%arg0: i32) -> (i32, i32) {
    %c0_i32 = arith.constant 0 : i32
    %c0_i32_0 = arith.constant 0 : i32
    return %arg0, %c0_i32 : i32, i32
  }
}

</mosaic_0001>

<llo_original>
// kernel: roberta_classification_head.1
$region0: #{roberta_classification_head.1}
  #allocation0 [shape = 'u32[]', space=smem, size = 0x4, offset = 0x4, fixed_abs, tag = 'smem constant byte address 0x4 - core index']
  #allocation1 [shape = 'u32[144,128]{1,0:T(1,128)}', space=vmem, size = 0x12000, scoped, tag = 'internal scratch']
  %s0 = inlined_call_operand.vmem [shape: f32[8,128], index: 0, kind: input, shape index: {}]
  %s1 = inlined_call_operand.hbm [shape: bf16[128,128], index: 1, kind: input, shape index: {}]
  %s2 = inlined_call_operand.vmem [shape: f32[1,128], index: 2, kind: input, shape index: {}]
  %s3 = inlined_call_operand.hbm [shape: bf16[128,128], index: 3, kind: input, shape index: {}]
  %s4 = inlined_call_operand.vmem [shape: f32[1,128], index: 4, kind: input, shape index: {}]
  %s5 = inlined_call_operand.vmem [shape: f32[8,128], index: 5, kind: output, shape index: {}]
  %s6 = sld [smem:[#allocation0]]
  $region38: #{roberta_classification_head.1} parent=0
    _
  %s8 = ssub.s32 1, %s6
  %s9 = scalar_select 0, %s8, %s6
  $region1: #{roberta_classification_head.1} parent=0
    #allocation2 [shape = 'u8[32768]{0}', space=vmem, size = 0x8000, scoped, tag = 'input window, operand 1, single buffered']
    #allocation3 [shape = 's32[1]{0}', space=sflag, size = 0x4, scoped, tag = 'scoped memory for roberta_classification_head.1']
    #allocation4 [shape = 'u8[32768]{0}', space=vmem, size = 0x8000, scoped, tag = 'input window, operand 3, single buffered']
    #allocation5 [shape = 's32[1]{0}', space=sflag, size = 0x4, scoped, tag = 'scoped memory for roberta_classification_head.1']
    %10 = vsyncpa [#allocation3], 0
    %11 = vsyncpa [#allocation5], 0
    // Predicated region
    $region2: #{roberta_classification_head.1} parent=1 // pred_check
      _
    $region3: #{roberta_classification_head.1} parent=1 // pred_check_branch
      %13 = sbr.rel (0) target = $region5
    $region4: #{roberta_classification_head.1} parent=1 // pred_region
      _
    $region5: #{roberta_classification_head.1} parent=1 // pred_fallthru
      _
    // Predicated region
    $region6: #{roberta_classification_head.1} parent=1 // pred_check
      _
    $region7: #{roberta_classification_head.1} parent=1 // pred_check_branch
      %15 = sbr.rel (0) target = $region9
    $region8: #{roberta_classification_head.1} parent=1 // pred_region
      %s17 = ssub.s32 1024, 1024
      %18 = vsyncadd [#allocation3], %s17
      %s19 = sshll.u32 [#allocation2], 4
      %s20 = int_to_ptr.vmem [resolvable:$true] %s19
      %25 = dma.hbm_to_vmem [thread:$0]  %s1, 1024, %s20, [#allocation3], 64, 64, 4
    $region9: #{roberta_classification_head.1} parent=1 // pred_fallthru
      _
    // Predicated region
    $region10: #{roberta_classification_head.1} parent=1 // pred_check
      _
    $region11: #{roberta_classification_head.1} parent=1 // pred_check_branch
      %27 = sbr.rel (0) target = $region13
    $region12: #{roberta_classification_head.1} parent=1 // pred_region
      _
    $region13: #{roberta_classification_head.1} parent=1 // pred_fallthru
      _
    // Predicated region
    $region14: #{roberta_classification_head.1} parent=1 // pred_check
      _
    $region15: #{roberta_classification_head.1} parent=1 // pred_check_branch
      %29 = sbr.rel (0) target = $region17
    $region16: #{roberta_classification_head.1} parent=1 // pred_region
      %s31 = ssub.s32 1024, 1024
      %32 = vsyncadd [#allocation5], %s31
      %s33 = sshll.u32 [#allocation4], 4
      %s34 = int_to_ptr.vmem [resolvable:$true] %s33
      %39 = dma.hbm_to_vmem [thread:$0]  %s3, 1024, %s34, [#allocation5], 64, 64, 4
    $region17: #{roberta_classification_head.1} parent=1 // pred_fallthru
      _
    // Predicated region
    $region18: #{roberta_classification_head.1} parent=1 // pred_check
      _
    $region19: #{roberta_classification_head.1} parent=1 // pred_check_branch
      %41 = sbr.rel (0) target = $region21
    $region20: #{roberta_classification_head.1} parent=1 // pred_region
      _
    $region21: #{roberta_classification_head.1} parent=1 // pred_fallthru
      _
    // Predicated region
    $region22: #{roberta_classification_head.1} parent=1 // pred_check
      _
    $region23: #{roberta_classification_head.1} parent=1 // pred_check_branch
      %43 = sbr.rel (0) target = $region25
    $region24: #{roberta_classification_head.1} parent=1 // pred_region
      %44 = dma.done [#allocation3], 1024
    $region25: #{roberta_classification_head.1} parent=1 // pred_fallthru
      _
    // Predicated region
    $region26: #{roberta_classification_head.1} parent=1 // pred_check
      _
    $region27: #{roberta_classification_head.1} parent=1 // pred_check_branch
      %46 = sbr.rel (0) target = $region29
    $region28: #{roberta_classification_head.1} parent=1 // pred_region
      %47 = dma.done [#allocation5], 1024
    $region29: #{roberta_classification_head.1} parent=1 // pred_fallthru
      _
    %v49 = vld [vmem:[%s0] sm:$0xff]
    %v50 = vpack.c.bf16 %v49, %v49
    %v51 = vld [vmem:[#allocation2] sm:$0xf]
    %v52 = vld [vmem:[#allocation2 + $0x4] sm:$0xf]
    %v53 = vld [vmem:[#allocation2 + $0x8] sm:$0xf]
    %v54 = vld [vmem:[#allocation2 + $0xc] sm:$0xf]
    %v55 = vld [vmem:[#allocation2 + $0x10] sm:$0xf]
    %v56 = vld [vmem:[#allocation2 + $0x14] sm:$0xf]
    %v57 = vld [vmem:[#allocation2 + $0x18] sm:$0xf]
    %v58 = vld [vmem:[#allocation2 + $0x1c] sm:$0xf]
    %v59 = vld [vmem:[#allocation2 + $0x20] sm:$0xf]
    %v60 = vld [vmem:[#allocation2 + $0x24] sm:$0xf]
    %v61 = vld [vmem:[#allocation2 + $0x28] sm:$0xf]
    %v62 = vld [vmem:[#allocation2 + $0x2c] sm:$0xf]
    %v63 = vld [vmem:[#allocation2 + $0x30] sm:$0xf]
    %v64 = vld [vmem:[#allocation2 + $0x34] sm:$0xf]
    %v65 = vld [vmem:[#allocation2 + $0x38] sm:$0xf]
    %v66 = vld [vmem:[#allocation2 + $0x3c] sm:$0xf]
    %v67 = vld [vmem:[%s2] sm:$0x1]
    %v69 = vlaneseq
    %v70 = vshrl.u32 %v69, 7
    %v71 = vsub.s32 0, %v70
    %v72 = vrot.slane %v67, %v71
    %v90 = vunpack.c.l.b16 %v51
    %v91 = vunpack.c.l.b16 %v52
    %v92 = vunpack.c.l.b16 %v53
    %v93 = vunpack.c.l.b16 %v54
    %v94 = vunpack.c.l.b16 %v55
    %v95 = vunpack.c.l.b16 %v56
    %v96 = vunpack.c.l.b16 %v57
    %v97 = vunpack.c.l.b16 %v58
    %v98 = vunpack.c.l.b16 %v59
    %v99 = vunpack.c.l.b16 %v60
    %v100 = vunpack.c.l.b16 %v61
    %v101 = vunpack.c.l.b16 %v62
    %v102 = vunpack.c.l.b16 %v63
    %v103 = vunpack.c.l.b16 %v64
    %v104 = vunpack.c.l.b16 %v65
    %v105 = vunpack.c.l.b16 %v66
    %v106 = vpack.c.b16 %v91, %v90
    %v107 = vpack.c.b16 %v93, %v92
    %v108 = vpack.c.b16 %v95, %v94
    %v109 = vpack.c.b16 %v97, %v96
    %v110 = vpack.c.b16 %v99, %v98
    %v111 = vpack.c.b16 %v101, %v100
    %v112 = vpack.c.b16 %v103, %v102
    %v113 = vpack.c.b16 %v105, %v104
    %122 = vmatprep.subr.bf16.mxu0 0
    %123 = vmatpush1.bf16.msra.mxu0 %v106
    %124 = vmatprep.subr.bf16.mxu0 0
    %125 = vmatpush1.bf16.msra.mxu0 %v107
    %126 = vmatprep.subr.bf16.mxu0 0
    %127 = vmatpush1.bf16.msra.mxu0 %v108
    %128 = vmatprep.subr.bf16.mxu0 0
    %129 = vmatpush1.bf16.msra.mxu0 %v109
    %130 = vmatprep.subr.bf16.mxu0 0
    %131 = vmatpush1.bf16.msra.mxu0 %v110
    %132 = vmatprep.subr.bf16.mxu0 0
    %133 = vmatpush1.bf16.msra.mxu0 %v111
    %134 = vmatprep.subr.bf16.mxu0 0
    %135 = vmatpush1.bf16.msra.mxu0 %v112
    %136 = vmatprep.subr.bf16.mxu0 0
    %137 = vmatpush1.bf16.msra.mxu0 %v113
    %138 = vmatprep.subr.bf16.mxu0 0
    %139 = vmatpush1.bf16.msra.mxu0 0
    %140 = vmatprep.subr.bf16.mxu0 0
    %141 = vmatpush1.bf16.msra.mxu0 0
    %142 = vmatprep.subr.bf16.mxu0 0
    %143 = vmatpush1.bf16.msra.mxu0 0
    %144 = vmatprep.subr.bf16.mxu0 0
    %145 = vmatpush1.bf16.msra.mxu0 0
    %146 = vmatprep.subr.bf16.mxu0 0
    %147 = vmatpush1.bf16.msra.mxu0 0
    %148 = vmatprep.subr.bf16.mxu0 0
    %149 = vmatpush1.bf16.msra.mxu0 0
    %150 = vmatprep.subr.bf16.mxu0 0
    %151 = vmatpush1.bf16.msra.mxu0 0
    %152 = vmatprep.subr.bf16.mxu0 0
    %153 = vmatpush1.bf16.msra.mxu0 0
    %154 = vmatprep.mubr.bf16.mxu0 0
    %155 = vmatmul.mubr.bf16.gmra.mrb[0].mxu0 %v50
    %v156 = vpop.f32.mrb[0].mxu0
    %v157 = vadd.f32 %v72, %v156
    %v158 = vpop.f32.mrb[0].mxu0
    %v159 = vpop.f32.mrb[0].mxu0
    %v160 = vpop.f32.mrb[0].mxu0
    %161 = vdwg.mxu0
    %v162 = vpack.c.bf16 %v157, %v157
    %v163 = vtanh.bf16.pop %v162
    %v164 = vld [vmem:[#allocation4] sm:$0xf]
    %v165 = vld [vmem:[#allocation4 + $0x4] sm:$0xf]
    %v166 = vld [vmem:[#allocation4 + $0x8] sm:$0xf]
    %v167 = vld [vmem:[#allocation4 + $0xc] sm:$0xf]
    %v168 = vld [vmem:[#allocation4 + $0x10] sm:$0xf]
    %v169 = vld [vmem:[#allocation4 + $0x14] sm:$0xf]
    %v170 = vld [vmem:[#allocation4 + $0x18] sm:$0xf]
    %v171 = vld [vmem:[#allocation4 + $0x1c] sm:$0xf]
    %v172 = vld [vmem:[#allocation4 + $0x20] sm:$0xf]
    %v173 = vld [vmem:[#allocation4 + $0x24] sm:$0xf]
    %v174 = vld [vmem:[#allocation4 + $0x28] sm:$0xf]
    %v175 = vld [vmem:[#allocation4 + $0x2c] sm:$0xf]
    %v176 = vld [vmem:[#allocation4 + $0x30] sm:$0xf]
    %v177 = vld [vmem:[#allocation4 + $0x34] sm:$0xf]
    %v178 = vld [vmem:[#allocation4 + $0x38] sm:$0xf]
    %v179 = vld [vmem:[#allocation4 + $0x3c] sm:$0xf]
    %v180 = vld [vmem:[%s4] sm:$0x1]
    %v182 = vlaneseq
    %v183 = vshrl.u32 %v182, 7
    %v184 = vsub.s32 0, %v183
    %v185 = vrot.slane %v180, %v184
    %v203 = vunpack.c.l.b16 %v164
    %v204 = vunpack.c.l.b16 %v165
    %v205 = vunpack.c.l.b16 %v166
    %v206 = vunpack.c.l.b16 %v167
    %v207 = vunpack.c.l.b16 %v168
    %v208 = vunpack.c.l.b16 %v169
    %v209 = vunpack.c.l.b16 %v170
    %v210 = vunpack.c.l.b16 %v171
    %v211 = vunpack.c.l.b16 %v172
    %v212 = vunpack.c.l.b16 %v173
    %v213 = vunpack.c.l.b16 %v174
    %v214 = vunpack.c.l.b16 %v175
    %v215 = vunpack.c.l.b16 %v176
    %v216 = vunpack.c.l.b16 %v177
    %v217 = vunpack.c.l.b16 %v178
    %v218 = vunpack.c.l.b16 %v179
    %v219 = vpack.c.b16 %v204, %v203
    %v220 = vpack.c.b16 %v206, %v205
    %v221 = vpack.c.b16 %v208, %v207
    %v222 = vpack.c.b16 %v210, %v209
    %v223 = vpack.c.b16 %v212, %v211
    %v224 = vpack.c.b16 %v214, %v213
    %v225 = vpack.c.b16 %v216, %v215
    %v226 = vpack.c.b16 %v218, %v217
    %235 = vmatprep.subr.bf16.mxu0 0
    %236 = vmatpush1.bf16.msra.mxu0 %v219
    %237 = vmatprep.subr.bf16.mxu0 0
    %238 = vmatpush1.bf16.msra.mxu0 %v220
    %239 = vmatprep.subr.bf16.mxu0 0
    %240 = vmatpush1.bf16.msra.mxu0 %v221
    %241 = vmatprep.subr.bf16.mxu0 0
    %242 = vmatpush1.bf16.msra.mxu0 %v222
    %243 = vmatprep.subr.bf16.mxu0 0
    %244 = vmatpush1.bf16.msra.mxu0 %v223
    %245 = vmatprep.subr.bf16.mxu0 0
    %246 = vmatpush1.bf16.msra.mxu0 %v224
    %247 = vmatprep.subr.bf16.mxu0 0
    %248 = vmatpush1.bf16.msra.mxu0 %v225
    %249 = vmatprep.subr.bf16.mxu0 0
    %250 = vmatpush1.bf16.msra.mxu0 %v226
    %251 = vmatprep.subr.bf16.mxu0 0
    %252 = vmatpush1.bf16.msra.mxu0 0
    %253 = vmatprep.subr.bf16.mxu0 0
    %254 = vmatpush1.bf16.msra.mxu0 0
    %255 = vmatprep.subr.bf16.mxu0 0
    %256 = vmatpush1.bf16.msra.mxu0 0
    %257 = vmatprep.subr.bf16.mxu0 0
    %258 = vmatpush1.bf16.msra.mxu0 0
    %259 = vmatprep.subr.bf16.mxu0 0
    %260 = vmatpush1.bf16.msra.mxu0 0
    %261 = vmatprep.subr.bf16.mxu0 0
    %262 = vmatpush1.bf16.msra.mxu0 0
    %263 = vmatprep.subr.bf16.mxu0 0
    %264 = vmatpush1.bf16.msra.mxu0 0
    %265 = vmatprep.subr.bf16.mxu0 0
    %266 = vmatpush1.bf16.msra.mxu0 0
    %267 = vmatprep.mubr.bf16.mxu0 0
    %268 = vmatmul.mubr.bf16.gmra.mrb[0].mxu0 %v163
    %v269 = vpop.f32.mrb[0].mxu0
    %v270 = vadd.f32 %v185, %v269
    %v271 = vpop.f32.mrb[0].mxu0
    %v272 = vpop.f32.mrb[0].mxu0
    %v273 = vpop.f32.mrb[0].mxu0
    %274 = vdwg.mxu0
    %275 = vst [vmem:[%s5] sm:$0xff] %v270
    // Predicated region
    $region30: #{roberta_classification_head.1} parent=1 // pred_check
      _
    $region31: #{roberta_classification_head.1} parent=1 // pred_check_branch
      %277 = sbr.rel (0) target = $region33
    $region32: #{roberta_classification_head.1} parent=1 // pred_region
      _
    $region33: #{roberta_classification_head.1} parent=1 // pred_fallthru
      _
    // Predicated region
    $region34: #{roberta_classification_head.1} parent=1 // pred_check
      _
    $region35: #{roberta_classification_head.1} parent=1 // pred_check_branch
      %279 = sbr.rel (0) target = $region37
    $region36: #{roberta_classification_head.1} parent=1 // pred_region
      _
    $region37: #{roberta_classification_head.1} parent=1 // pred_fallthru
      _
    %280 = vsyncpa [#allocation3], 1
    %281 = vsyncpa [#allocation5], 1

</llo_original>
